<compile_context>
chip_gen: v7x
topology: tpu7x:2x2x1
jax: 0.10.0
libtpu: 0.0.40
codegen_flags: <defaults>
</compile_context>

<pallas_src>
import jax
import jax.numpy as jnp
from jax.experimental import pallas as pl
from jax.experimental.pallas import tpu as pltpu


def inspiration_kernel(pt_ref, x_ref, o_ref):
    # pt_ref : (C, C)  = P^T, resident in VMEM every grid step
    # x_ref  : (1, C, tHW) spatial tile of one batch element (native dtype)
    # o_ref  : (1, C, tHW)
    y = jnp.dot(pt_ref[...], x_ref[0], preferred_element_type=jnp.float32)
    o_ref[0] = y.astype(o_ref.dtype)


def inspiration_forward(weight, G, X, *, tile_hw=2048):
    """weight: (1, C, C); G: (B=1, C, C); X: (N, C, H, W) -> (N, C, H, W)."""
    N, C, H, W = X.shape
    HW = H * W

    # Hoist the batch-invariant P^T out of the kernel (tiny CxC matmul in XLA).
    P = jnp.matmul(weight.reshape(C, C), G.reshape(C, C),
                   preferred_element_type=jnp.float32)
    Pt = P.T.astype(X.dtype)                      # (C, C), same dtype as activations

    # Flatten spatial dims; pad HW to a multiple of 128 for lane-dense stores.
    x_flat = X.reshape(N, C, HW)
    pad = (-HW) % 128
    if pad:
        x_flat = jnp.pad(x_flat, ((0, 0), (0, 0), (0, pad)))
    HWp = HW + pad

    # Pick a lane tile: multiple of 128, divides HWp, capped at tile_hw.
    t = min(tile_hw, HWp)
    t -= t % 128
    t = max(t, 128)
    while HWp % t != 0:
        t -= 128
    num_tiles = HWp // t

    itemsize = jnp.dtype(X.dtype).itemsize
    cost = pl.CostEstimate(
        flops=2 * C * C * N * HWp,
        bytes_accessed=(2 * N * C * HWp + C * C) * itemsize,
        transcendentals=0,
    )

    out_flat = pl.pallas_call(
        inspiration_kernel,
        out_shape=jax.ShapeDtypeStruct((N, C, HWp), X.dtype),
        grid_spec=pltpu.PrefetchScalarGridSpec(
            num_scalar_prefetch=0,
            grid=(N, num_tiles),
            in_specs=[
                pl.BlockSpec((C, C), lambda n, s: (0, 0)),        # P^T (resident)
                pl.BlockSpec((1, C, t), lambda n, s: (n, 0, s)),  # X tile
            ],
            out_specs=pl.BlockSpec((1, C, t), lambda n, s: (n, 0, s)),
        ),
        compiler_params=pltpu.CompilerParams(
            dimension_semantics=("parallel", "parallel")),
        cost_estimate=cost,
    )(Pt, x_flat)

    if pad:
        out_flat = out_flat[:, :, :HW]
    return out_flat.reshape(N, C, H, W)


if __name__ == "__main__":
    # Small shapes consistent with the module: N=2, C=32, H=W=16, B=1
    N, C, H, W = 2, 32, 16, 16
    key = jax.random.PRNGKey(0)
    k_w, k_g, k_x = jax.random.split(key, 3)

    # Deterministic parameter init mirroring reset_parameters(): U(0.0, 0.02)
    weight = jax.random.uniform(k_w, (1, C, C), jnp.float32, 0.0, 0.02)
    # Target Gram matrix buffer G (normally set via setTarget); synthetic here.
    G = jax.random.normal(k_g, (1, C, C), jnp.float32)
    X = jax.random.normal(k_x, (N, C, H, W), jnp.float32)

    out = inspiration_forward(weight, G, X)
    out = jax.block_until_ready(out)

    # Pure-JAX reference for correctness
    P_ref = jnp.matmul(weight[0], G[0])                                    # (C, C)
    ref = jnp.matmul(P_ref.T[None], X.reshape(N, C, H * W)).reshape(N, C, H, W)

    assert out.shape == X.shape and out.dtype == X.dtype
    assert jnp.allclose(out, ref, atol=1e-4, rtol=1e-4)
    print("KERNEL_OK")
</pallas_src>

<mosaic_0001>
module attributes {stable_mosaic.version = 11 : i64} {
  func.func @inspiration_kernel(%arg0: i32, %arg1: i32, %arg2: memref<32x32xf32, #tpu.memory_space<vmem>>, %arg3: memref<1x32x256xf32, #tpu.memory_space<vmem>>, %arg4: memref<1x32x256xf32, #tpu.memory_space<vmem>>) attributes {dimension_semantics = [#tpu.dimension_semantics<parallel>, #tpu.dimension_semantics<parallel>], iteration_bounds = array<i64: 2, 1>, scalar_prefetch = 0 : i64, scratch_operands = 0 : i64, tpu.core_type = #tpu.core_type<tc>, window_params = [{pipeline_mode = #tpu.pipeline_mode<synchronous>, transform_indices = @transform_0, window_bounds = array<i64: 32, 32>}, {transform_indices = @transform_1, window_bounds = array<i64: 1, 32, 256>}, {transform_indices = @transform_2, window_bounds = array<i64: 1, 32, 256>}]} {
    %c0 = arith.constant 0 : index
    %c0_0 = arith.constant 0 : index
    %0 = vector.load %arg2[%c0, %c0_0] : memref<32x32xf32, #tpu.memory_space<vmem>>, vector<32x32xf32>
    %c0_1 = arith.constant 0 : index
    %c0_2 = arith.constant 0 : index
    %c0_3 = arith.constant 0 : index
    %1 = vector.load %arg3[%c0_1, %c0_2, %c0_3] : memref<1x32x256xf32, #tpu.memory_space<vmem>>, vector<1x32x256xf32>
    %2 = vector.shape_cast %1 : vector<1x32x256xf32> to vector<32x256xf32>
    %cst = arith.constant dense<0.000000e+00> : vector<32x256xf32>
    %3 = tpu.matmul %0, %2, %cst {dimension_numbers = #tpu.dot_dimension_numbers<[1], [0], [0], [1], [0, 0, 1, 1], [], []>} : vector<32x32xf32>, vector<32x256xf32>, vector<32x256xf32> -> vector<32x256xf32>
    %c0_4 = arith.constant 0 : index
    %c0_5 = arith.constant 0 : index
    %c0_6 = arith.constant 0 : index
    %4 = vector.load %arg4[%c0_4, %c0_5, %c0_6] : memref<1x32x256xf32, #tpu.memory_space<vmem>>, vector<1x32x256xf32>
    %5 = vector.shape_cast %4 : vector<1x32x256xf32> to vector<32x256xf32>
    %6 = vector.shape_cast %3 : vector<32x256xf32> to vector<1x32x256xf32>
    tpu.vector_store %arg4[%c0_4, %c0_5, %c0_6], %6 {strides = array<i32>} : memref<1x32x256xf32, #tpu.memory_space<vmem>>, vector<1x32x256xf32>,
    return
  }
  func.func @transform_0(%arg0: i32, %arg1: i32) -> (i32, i32) {
    %c0_i32 = arith.constant 0 : i32
    %c0_i32_0 = arith.constant 0 : i32
    %c0_i32_1 = arith.constant 0 : i32
    return %c0_i32, %c0_i32_0 : i32, i32
  }
  func.func @transform_1(%arg0: i32, %arg1: i32) -> (i32, i32, i32) {
    %c0_i32 = arith.constant 0 : i32
    %c0_i32_0 = arith.constant 0 : i32
    return %arg0, %c0_i32, %arg1 : i32, i32, i32
  }
  func.func @transform_2(%arg0: i32, %arg1: i32) -> (i32, i32, i32) {
    %c0_i32 = arith.constant 0 : i32
    %c0_i32_0 = arith.constant 0 : i32
    return %arg0, %c0_i32, %arg1 : i32, i32, i32
  }
}

</mosaic_0001>

<llo_original>
// kernel: tpu_custom_call.1
$region0: #{tpu_custom_call.1}
  #allocation0 [shape = 'u32[]', space=smem, size = 0x4, offset = 0x4, fixed_abs, tag = 'smem constant byte address 0x4 - core index']
  #allocation1 [shape = 'u32[144,128]{1,0:T(1,128)}', space=vmem, size = 0x12000, scoped, tag = 'internal scratch']
  %s0 = inlined_call_operand.hbm [shape: f32[32,32], index: 0, kind: input, shape index: {}]
  %s1 = inlined_call_operand.hbm [shape: f32[2,32,256], index: 1, kind: input, shape index: {}]
  %s2 = inlined_call_operand.hbm [shape: f32[2,32,256], index: 2, kind: output, shape index: {}]
  %s3 = sld [smem:[#allocation0]]
  $region49: #{tpu_custom_call.1} parent=0
    _
  %s5 = ssub.s32 1, %s3
  %s6 = scalar_select 0, %s5, %s3
  $region1: #{tpu_custom_call.1} parent=0
    #allocation2 [shape = 'u8[16384]{0}', space=vmem, size = 0x4000, scoped, tag = 'input window, operand 0, single buffered']
    #allocation3 [shape = 's32[2]{0}', space=sflag, size = 0x8, scoped, tag = 'scoped memory for tpu_custom_call.1']
    #allocation4 [shape = 's32[2]{0}', space=sflag, size = 0x8, scoped, tag = 'scoped memory for tpu_custom_call.1']
    #allocation5 [shape = 'u8[65536]{0}', space=vmem, size = 0x10000, scoped, tag = 'input window, operand 1']
    #allocation6 [shape = 's32[2]{0}', space=sflag, size = 0x8, scoped, tag = 'scoped memory for tpu_custom_call.1']
    #allocation7 [shape = 'u8[65536]{0}', space=vmem, size = 0x10000, scoped, tag = 'output window, operand 0']
    %7 = vsyncpa [#allocation3], 0
    %8 = vsyncpa [#allocation6], 0
    %s9 = scalar_lea.sflag [#allocation6], 1
    %10 = vsyncpa %s9, 0
    %11 = vsyncpa [#allocation4], 0
    %s12 = scalar_lea.sflag [#allocation4], 1
    %13 = vsyncpa %s12, 0
    loop: start=0, step=1, limit=4
    $region2: #{tpu_custom_call.1} parent=1 // loop_pre_header
      _
    $region3: #{tpu_custom_call.1} parent=1 // loop_header
      %s15 = sphi 0, %s19
      %p16 = scmp.ge.s32.totalorder %s15, 4
      %s22 = sphi 0, %s34
      %s23 = sphi 0, %s30
      %s24 = sphi 0, %s22
      %s25 = sphi 0, %s23
      %s26 = sphi 0, %s24
      %s27 = sphi 0, %s25
      %s35 = sphi 0, %s35
      %s37 = sphi 0, %s35
      %s38 = sphi 0, %s37
      %s52 = sphi 0, %s38
      %s60 = sphi 0, %s62
      %s63 = sphi 0, %s60
      %s64 = sphi 0, %s63
      %s80 = sphi 0, %s64
      %s88 = sphi 0, %s90
      %s91 = sphi 0, %s88
      %s92 = sphi 0, %s91
      %s108 = sphi 0, %s92
    $region4: #{tpu_custom_call.1} parent=1 // loop_header_branch
      %18 = sbr.rel (%p16) target = $region8
    $region5: #{tpu_custom_call.1} parent=1 // loop_body
      %s20 = ssub.s32 %s15, 1
      %s21 = ssub.s32 %s15, 2
      %s28 = sadd.s32 1, %s23
      %p29 = scmp.ge.s32.totalorder %s28, 1
      %s30 = scalar_select %p29, 0, %s28
      %s31 = sadd.s32 1, %s22
      %s32 = scalar_select %p29, %s31, %s22
      %p33 = scmp.ge.s32.totalorder %s32, 2
      %s34 = scalar_select %p33, 0, %s32
      %s36 = sadd.s32 %s35, 1
      %p39 = scmp.eq.s32.totalorder %s15, 1
      %p40 = scmp.ne.s32.totalorder %s35, %s37
      %p41 = scmp.eq.s32.totalorder %s15, 0
      %p42 = por %p40, %p41
      %p43 = scmp.ne.s32.totalorder %s35, %s37
      %p44 = scmp.eq.s32.totalorder %s20, 1
      %p45 = por %p43, %p44
      %p46 = scmp.ne.s32.totalorder %s37, %s38
      %p47 = scmp.eq.s32.totalorder %s20, 0
      %p48 = por %p46, %p47
      %p49 = scmp.ne.s32.totalorder %s37, %s38
      %p50 = scmp.eq.s32.totalorder %s21, 1
      %p51 = por %p49, %p50
      %p53 = scmp.ne.s32.totalorder %s38, %s52
      %p54 = scmp.eq.s32.totalorder %s21, 0
      %p55 = por %p53, %p54
      %s56 = ssub.s32 %s22, %s34
      %s57 = ssub.s32 %s23, %s30
      %s58 = sor.u32 %s56, %s57
      %p59 = scmp.eq.s32.totalorder %s58, 0
      %s61 = sadd.s32 %s60, 1
      %s62 = scalar_select %p59, %s60, %s61
      %p65 = pneg %p59
      %p66 = scmp.eq.s32.totalorder %s15, 1
      %p67 = por %p65, %p66
      %p68 = scmp.ne.s32.totalorder %s60, %s63
      %p69 = scmp.eq.s32.totalorder %s15, 0
      %p70 = por %p68, %p69
      %p71 = scmp.ne.s32.totalorder %s60, %s63
      %p72 = scmp.eq.s32.totalorder %s20, 1
      %p73 = por %p71, %p72
      %p74 = scmp.ne.s32.totalorder %s63, %s64
      %p75 = scmp.eq.s32.totalorder %s20, 0
      %p76 = por %p74, %p75
      %p77 = scmp.ne.s32.totalorder %s63, %s64
      %p78 = scmp.eq.s32.totalorder %s21, 1
      %p79 = por %p77, %p78
      %p81 = scmp.ne.s32.totalorder %s64, %s80
      %p82 = scmp.eq.s32.totalorder %s21, 0
      %p83 = por %p81, %p82
      %s84 = ssub.s32 %s22, %s34
      %s85 = ssub.s32 %s23, %s30
      %s86 = sor.u32 %s84, %s85
      %p87 = scmp.eq.s32.totalorder %s86, 0
      %s89 = sadd.s32 %s88, 1
      %s90 = scalar_select %p87, %s88, %s89
      %p93 = pneg %p87
      %p94 = scmp.eq.s32.totalorder %s15, 1
      %p95 = por %p93, %p94
      %p96 = scmp.ne.s32.totalorder %s88, %s91
      %p97 = scmp.eq.s32.totalorder %s15, 0
      %p98 = por %p96, %p97
      %p99 = scmp.ne.s32.totalorder %s88, %s91
      %p100 = scmp.eq.s32.totalorder %s20, 1
      %p101 = por %p99, %p100
      %p102 = scmp.ne.s32.totalorder %s91, %s92
      %p103 = scmp.eq.s32.totalorder %s20, 0
      %p104 = por %p102, %p103
      %p105 = scmp.ne.s32.totalorder %s91, %s92
      %p106 = scmp.eq.s32.totalorder %s21, 1
      %p107 = por %p105, %p106
      %p109 = scmp.ne.s32.totalorder %s92, %s108
      %p110 = scmp.eq.s32.totalorder %s21, 0
      %p111 = por %p109, %p110
      %p112 = scmp.le.s32.totalorder 1, %s15
      %p113 = scmp.lt.s32.totalorder %s15, 3
      %p114 = pnand %p112, %p113
      %p115 = pneg %p114
      // Predicated region
      $region9: #{tpu_custom_call.1} parent=5 // pred_check
        _
      $region10: #{tpu_custom_call.1} parent=5 // pred_check_branch
        %117 = sbr.rel (%p114) target = $region12
      $region11: #{tpu_custom_call.1} parent=5 // pred_region
        %s118 = ssub.s32 %s15, 1
        // Predicated region
        $region13: #{tpu_custom_call.1} parent=11 // pred_check
          %p119 = pneg %p48
        $region14: #{tpu_custom_call.1} parent=11 // pred_check_branch
          %121 = sbr.rel (%p119) target = $region16
        $region15: #{tpu_custom_call.1} parent=11 // pred_region
          %s123 = ssub.s32 512, 512
          %124 = vsyncadd [#allocation3], %s123
          %s125 = sshll.u32 [#allocation2], 4
          %s126 = int_to_ptr.vmem [resolvable:$true] %s125
          %131 = dma.hbm_to_vmem [thread:$0]  %s0, 512, %s126, [#allocation3], 128, 128, 8
        $region16: #{tpu_custom_call.1} parent=11 // pred_fallthru
          _
      $region12: #{tpu_custom_call.1} parent=5 // pred_fallthru
        _
      %p132 = scmp.lt.s32.totalorder %s15, 2
      // Predicated region
      $region17: #{tpu_custom_call.1} parent=5 // pred_check
        %p133 = pneg %p132
      $region18: #{tpu_custom_call.1} parent=5 // pred_check_branch
        %135 = sbr.rel (%p133) target = $region20
      $region19: #{tpu_custom_call.1} parent=5 // pred_region
        // Predicated region
        $region21: #{tpu_custom_call.1} parent=19 // pred_check
          %p136 = pneg %p70
        $region22: #{tpu_custom_call.1} parent=19 // pred_check_branch
          %138 = sbr.rel (%p136) target = $region24
        $region23: #{tpu_custom_call.1} parent=19 // pred_region
          %s139 = sand.u32 %s60, 1
          %s140 = scalar_lea.sflag [#allocation6], %s139
          %s141 = sand.u32 %s60, 1
          %s142 = smul.addr %s141, 64
          %s143 = scalar_lea.vmem [#allocation5], %s142
          %s144 = smul.u32 2, %s23
          %s146 = ssub.s32 1024, 1024
          %147 = vsyncadd %s140, %s146
          %s148 = smul.addr %s22, 8
          %s149 = sadd.s32 %s144, %s148
          %s150 = smul.addr %s149, 128
          %s151 = scalar_lea.hbm %s1, %s150
          %s152 = sshll.u32 %s143, 4
          %s153 = int_to_ptr.vmem [resolvable:$true] %s152
          %158 = dma.hbm_to_vmem [thread:$0]  %s151, 1024, %s153, %s140, 256, 256, 16
        $region24: #{tpu_custom_call.1} parent=19 // pred_fallthru
          _
      $region20: #{tpu_custom_call.1} parent=5 // pred_fallthru
        _
      %p159 = scmp.le.s32.totalorder 1, %s15
      %p160 = scmp.lt.s32.totalorder %s15, 3
      %p161 = pnand %p159, %p160
      %p162 = pneg %p161
      // Predicated region
      $region25: #{tpu_custom_call.1} parent=5 // pred_check
        _
      $region26: #{tpu_custom_call.1} parent=5 // pred_check_branch
        %164 = sbr.rel (%p161) target = $region28
      $region27: #{tpu_custom_call.1} parent=5 // pred_region
        %s165 = ssub.s32 %s15, 1
        // Predicated region
        $region29: #{tpu_custom_call.1} parent=27 // pred_check
          %p166 = pneg %p48
        $region30: #{tpu_custom_call.1} parent=27 // pred_check_branch
          %168 = sbr.rel (%p166) target = $region32
        $region31: #{tpu_custom_call.1} parent=27 // pred_region
          %169 = dma.done [#allocation3], 512
        $region32: #{tpu_custom_call.1} parent=27 // pred_fallthru
          _
        %s170 = sand.u32 %s63, 1
        %s171 = scalar_lea.sflag [#allocation6], %s170
        %s172 = sand.u32 %s63, 1
        %s173 = smul.addr %s172, 64
        %s174 = scalar_lea.vmem [#allocation5], %s173
        // Predicated region
        $region33: #{tpu_custom_call.1} parent=27 // pred_check
          %p175 = pneg %p76
        $region34: #{tpu_custom_call.1} parent=27 // pred_check_branch
          %177 = sbr.rel (%p175) target = $region36
        $region35: #{tpu_custom_call.1} parent=27 // pred_region
          %178 = dma.done %s171, 1024
        $region36: #{tpu_custom_call.1} parent=27 // pred_fallthru
          _
        %p179 = pneg %p48
        %p180 = pneg %p45
        %s181 = sand.u32 %s63, 1
        %s182 = scalar_lea.sflag [#allocation6], %s181
        %s183 = sand.u32 %s63, 1
        %s184 = smul.addr %s183, 64
        %s185 = scalar_lea.vmem [#allocation5], %s184
        %p186 = pneg %p76
        %p187 = pneg %p73
        %p188 = pneg %p104
        %p189 = pneg %p101
        %s190 = sand.u32 %s91, 1
        %s191 = scalar_lea.sflag [#allocation4], %s190
        %s192 = sand.u32 %s91, 1
        %s193 = smul.addr %s192, 64
        %s194 = scalar_lea.vmem [#allocation7], %s193
        %s195 = smul.u32 2, %s25
        %s196 = smul.u32 2, %s25
        %v197 = vld [vmem:[#allocation2] sm:$0xff]
        %v198 = vld [vmem:[#allocation2 + $0x8] sm:$0xff]
        %v199 = vld [vmem:[#allocation2 + $0x10] sm:$0xff]
        %v200 = vld [vmem:[#allocation2 + $0x18] sm:$0xff]
        %v201 = vld [vmem:[%s174] sm:$0xff]
        %v202 = vld [vmem:[%s174 + $0x8] sm:$0xff]
        %v203 = vld [vmem:[%s174 + $0x10] sm:$0xff]
        %v204 = vld [vmem:[%s174 + $0x18] sm:$0xff]
        %v205 = vld [vmem:[%s174 + $0x20] sm:$0xff]
        %v206 = vld [vmem:[%s174 + $0x28] sm:$0xff]
        %v207 = vld [vmem:[%s174 + $0x30] sm:$0xff]
        %v208 = vld [vmem:[%s174 + $0x38] sm:$0xff]
        %vm209 = vcmask 261120
        %v211 = vsel %vm209, %v197, 0
        %v214 = vsel %vm209, %v198, 0
        %v217 = vsel %vm209, %v199, 0
        %v220 = vsel %vm209, %v200, 0
        %222 = vmatprep.subr.mxu0 %v202
        %223 = vmatpush1.msra.mxu0 %v201
        %224 = vmatprep.subr.mxu0 %v204
        %225 = vmatpush1.msra.mxu0 %v203
        %226 = vmatprep.subr.mxu0 %v206
        %227 = vmatpush1.msra.mxu0 %v205
        %228 = vmatprep.subr.mxu0 %v208
        %229 = vmatpush1.msra.mxu0 %v207
        %230 = vmatprep.subr.mxu0 0.0
        %231 = vmatpush1.msra.mxu0 0.0
        %232 = vmatprep.subr.mxu0 0.0
        %233 = vmatpush1.msra.mxu0 0.0
        %234 = vmatprep.subr.mxu0 0.0
        %235 = vmatpush1.msra.mxu0 0.0
        %236 = vmatprep.subr.mxu0 0.0
        %237 = vmatpush1.msra.mxu0 0.0
        %238 = vmatprep.subr.mxu0 0.0
        %239 = vmatpush1.msra.mxu0 0.0
        %240 = vmatprep.subr.mxu0 0.0
        %241 = vmatpush1.msra.mxu0 0.0
        %242 = vmatprep.subr.mxu0 0.0
        %243 = vmatpush1.msra.mxu0 0.0
        %244 = vmatprep.subr.mxu0 0.0
        %245 = vmatpush1.msra.mxu0 0.0
        %246 = vmatprep.subr.mxu0 0.0
        %247 = vmatpush1.msra.mxu0 0.0
        %248 = vmatprep.subr.mxu0 0.0
        %249 = vmatpush1.msra.mxu0 0.0
        %250 = vmatprep.subr.mxu0 0.0
        %251 = vmatpush1.msra.mxu0 0.0
        %252 = vmatprep.subr.mxu0 0.0
        %253 = vmatpush1.msra.mxu0 0.0
        %254 = vmatprep.subr.mxu0 0.0
        %255 = vmatpush1.msra.mxu0 0.0
        %256 = vmatprep.subr.mxu0 0.0
        %257 = vmatpush1.msra.mxu0 0.0
        %258 = vmatprep.subr.mxu0 0.0
        %259 = vmatpush1.msra.mxu0 0.0
        %260 = vmatprep.subr.mxu0 0.0
        %261 = vmatpush1.msra.mxu0 0.0
        %262 = vmatprep.subr.mxu0 0.0
        %263 = vmatpush1.msra.mxu0 0.0
        %264 = vmatprep.subr.mxu0 0.0
        %265 = vmatpush1.msra.mxu0 0.0
        %266 = vmatprep.subr.mxu0 0.0
        %267 = vmatpush1.msra.mxu0 0.0
        %268 = vmatprep.subr.mxu0 0.0
        %269 = vmatpush1.msra.mxu0 0.0
        %270 = vmatprep.subr.mxu0 0.0
        %271 = vmatpush1.msra.mxu0 0.0
        %272 = vmatprep.subr.mxu0 0.0
        %273 = vmatpush1.msra.mxu0 0.0
        %274 = vmatprep.subr.mxu0 0.0
        %275 = vmatpush1.msra.mxu0 0.0
        %276 = vmatprep.subr.mxu0 0.0
        %277 = vmatpush1.msra.mxu0 0.0
        %278 = vmatprep.subr.mxu0 0.0
        %279 = vmatpush1.msra.mxu0 0.0
        %280 = vmatprep.subr.mxu0 0.0
        %281 = vmatpush1.msra.mxu0 0.0
        %282 = vmatprep.subr.mxu0 0.0
        %283 = vmatpush1.msra.mxu0 0.0
        %284 = vmatprep.subr.mxu0 0.0
        %285 = vmatpush1.msra.mxu0 0.0
        %286 = vmatprep.mubr.f32.mxu0 0.0
        %287 = vmatmul.mubr.f32.gmra.mrb[0].mxu0 %v211
        %v288 = vpop.f32.mrb[0].mxu0
        %v289 = vadd.f32 0.0, %v288
        %v290 = vpop.f32.mrb[0].mxu0
        %v291 = vadd.f32 0.0, %v290
        %292 = vmatprep.mubr.f32.mxu0 0.0
        %293 = vmatmul.mubr.f32.gmra.mrb[0].mxu0 %v214
        %v294 = vpop.f32.mrb[0].mxu0
        %v295 = vadd.f32 0.0, %v294
        %v296 = vpop.f32.mrb[0].mxu0
        %v297 = vadd.f32 0.0, %v296
        %298 = vmatprep.mubr.f32.mxu0 0.0
        %299 = vmatmul.mubr.f32.gmra.mrb[0].mxu0 %v217
        %v300 = vpop.f32.mrb[0].mxu0
        %v301 = vadd.f32 0.0, %v300
        %v302 = vpop.f32.mrb[0].mxu0
        %v303 = vadd.f32 0.0, %v302
        %304 = vmatprep.mubr.f32.mxu0 0.0
        %305 = vmatmul.mubr.f32.gmra.mrb[0].mxu0 %v220
        %v306 = vpop.f32.mrb[0].mxu0
        %v307 = vadd.f32 0.0, %v306
        %v308 = vpop.f32.mrb[0].mxu0
        %v309 = vadd.f32 0.0, %v308
        %310 = vdwg.mxu0
        %311 = vst [vmem:[%s194] sm:$0xff] %v289
        %312 = vst [vmem:[%s194 + $0x8] sm:$0xff] %v291
        %313 = vst [vmem:[%s194 + $0x10] sm:$0xff] %v295
        %314 = vst [vmem:[%s194 + $0x18] sm:$0xff] %v297
        %315 = vst [vmem:[%s194 + $0x20] sm:$0xff] %v301
        %316 = vst [vmem:[%s194 + $0x28] sm:$0xff] %v303
        %317 = vst [vmem:[%s194 + $0x30] sm:$0xff] %v307
        %318 = vst [vmem:[%s194 + $0x38] sm:$0xff] %v309
        %s319 = sand.u32 %s91, 1
        %s320 = scalar_lea.sflag [#allocation4], %s319
        %s321 = sand.u32 %s91, 1
        %s322 = smul.addr %s321, 64
        %s323 = scalar_lea.vmem [#allocation7], %s322
        // Predicated region
        $region37: #{tpu_custom_call.1} parent=27 // pred_check
          %p324 = pneg %p101
        $region38: #{tpu_custom_call.1} parent=27 // pred_check_branch
          %326 = sbr.rel (%p324) target = $region40
        $region39: #{tpu_custom_call.1} parent=27 // pred_region
          %s327 = smul.u32 2, %s25
          %s329 = ssub.s32 1024, 1024
          %330 = vsyncadd %s320, %s329
          %s331 = smul.addr %s24, 8
          %s332 = sadd.s32 %s327, %s331
          %s333 = smul.addr %s332, 128
          %s334 = scalar_lea.hbm %s2, %s333
          %s335 = sshll.u32 %s323, 4
          %s336 = int_to_ptr.vmem [resolvable:$true] %s335
          %341 = dma.vmem_to_hbm [thread:$0]  %s336, 1024, %s334, %s320, 256, 256, 16
        $region40: #{tpu_custom_call.1} parent=27 // pred_fallthru
          _
      $region28: #{tpu_custom_call.1} parent=5 // pred_fallthru
        _
      %p342 = scmp.le.s32.totalorder 2, %s15
      // Predicated region
      $region41: #{tpu_custom_call.1} parent=5 // pred_check
        %p343 = pneg %p342
      $region42: #{tpu_custom_call.1} parent=5 // pred_check_branch
        %345 = sbr.rel (%p343) target = $region44
      $region43: #{tpu_custom_call.1} parent=5 // pred_region
        %s346 = ssub.s32 %s15, 2
        // Predicated region
        $region45: #{tpu_custom_call.1} parent=43 // pred_check
          %p347 = pneg %p107
        $region46: #{tpu_custom_call.1} parent=43 // pred_check_branch
          %349 = sbr.rel (%p347) target = $region48
        $region47: #{tpu_custom_call.1} parent=43 // pred_region
          %s350 = sand.u32 %s92, 1
          %s351 = scalar_lea.sflag [#allocation4], %s350
          %s352 = sand.u32 %s92, 1
          %s353 = smul.addr %s352, 64
          %s354 = scalar_lea.vmem [#allocation7], %s353
          %355 = dma.done %s351, 1024
        $region48: #{tpu_custom_call.1} parent=43 // pred_fallthru
          _
      $region44: #{tpu_custom_call.1} parent=5 // pred_fallthru
        _
    $region6: #{tpu_custom_call.1} parent=1 // loop_footer
      %s19 = sadd.s32 1, %s15
    $region7: #{tpu_custom_call.1} parent=1 // loop_footer_branch
      %14 = sbr.rel target = $region3
    $region8: #{tpu_custom_call.1} parent=1 // loop_exit
      _
    %356 = vsyncpa [#allocation3], 1
    %s357 = scalar_lea.sflag [#allocation3], 1
    %358 = vsyncpa %s357, 1
    %359 = vsyncpa [#allocation6], 1
    %s360 = scalar_lea.sflag [#allocation6], 1
    %361 = vsyncpa %s360, 1
    %362 = vsyncpa [#allocation4], 1
    %s363 = scalar_lea.sflag [#allocation4], 1
    %364 = vsyncpa %s363, 1

</llo_original>
